<compile_context>
chip_gen: v5e
topology: v5e:2x2
jax: 0.10.0
libtpu: 0.0.40
codegen_flags: <defaults>
</compile_context>

<pallas_src>
import jax
import jax.numpy as jnp
from jax.experimental import pallas as pl
from jax.experimental.pallas import tpu as pltpu

_LANE = 128
_NEG_INF = -1e30  # padded-logit fill so padded columns contribute exp() == 0


def _round_up(x, m):
    return ((x + m - 1) // m) * m


def _vmem_capacity_bytes():
    """Per-TensorCore VMEM capacity; conservative (v7x) fallback."""
    try:
        return int(pltpu.get_tpu_info().vmem_capacity_bytes)
    except Exception:
        return 64 * 1024 * 1024


def cluster_kernel(h_ref, w_ref, b_ref, o_ref, acc_ref):
    """One (row-tile, k-tile) step of softmax(h @ W + b) over the feature axis."""
    k = pl.program_id(1)

    # Partial matmul for this k slice: cast h to bf16 right before the MXU
    # (h is DMA'd in its native dtype so HBM traffic stays 1x), f32 accumulate.
    partial = jnp.dot(h_ref[...].astype(jnp.bfloat16), w_ref[...],
                      preferred_element_type=jnp.float32)

    @pl.when(k == 0)
    def _():
        acc_ref[...] = partial

    @pl.when(k > 0)
    def _():
        acc_ref[...] += partial

    @pl.when(k == pl.num_programs(1) - 1)
    def _():
        # Bias add + numerically-stable softmax over the feature axis, in f32.
        logits = acc_ref[...] + b_ref[...]
        m = jnp.max(logits, axis=-1, keepdims=True)
        e = jnp.exp(logits - m)
        denom = jnp.sum(e, axis=-1, keepdims=True)
        o_ref[...] = (e * pl.reciprocal(denom, approx=True)).astype(o_ref.dtype)


def cluster_layer(h, w, b, *, max_tile_n=2048):
    """softmax(h @ w + b, axis=-1).

    h: (N, in_dims); w: (in_dims, out_dims) [pre-transposed vs. PyTorch's
    (out, in)]; b: (1, out_dims). Output dtype == h.dtype.
    """
    N, in_dims = h.shape
    out_dims = w.shape[1]
    out_dtype = h.dtype
    h_bytes = jnp.dtype(h.dtype).itemsize
    out_bytes = jnp.dtype(out_dtype).itemsize

    # ---- VMEM budget (generation-aware; v7x only has 64 MiB per TC). -------
    vmem_cap = _vmem_capacity_bytes()
    vmem_limit = int(vmem_cap * 3 // 4)   # leave headroom for compiler scratch
    budget = vmem_limit // 2              # use ~half for our explicit buffers

    # ---- Lane-dense output: pad feature axis to a multiple of 128. ---------
    out_p = _round_up(out_dims, _LANE)
    pad_c = out_p - out_dims

    # ---- Reduction (in_dims) tiling: keep the weight block within budget. --
    if 2 * (in_dims * out_p * 2) <= budget // 3:        # 2x = double buffering
        tile_k, in_dims_p = in_dims, in_dims            # single k step
    else:
        tile_k = max(_LANE, ((budget // 3) // (2 * out_p * 2)) // _LANE * _LANE)
        in_dims_p = _round_up(in_dims, tile_k)
    # TODO(synk): for out_p too large for VMEM, also tile out_p with an
    # online softmax (m/l/acc scratch); not needed at these sizes.

    # ---- Row tiling: VMEM-budget-driven, multiple of 8, >= 2 grid steps. ---
    per_row = (2 * tile_k * h_bytes            # double-buffered h tile
               + 2 * out_p * out_bytes         # double-buffered output tile
               + 4 * out_p * 4)                # f32 accumulator + temporaries
    w_block_bytes = 2 * tile_k * out_p * 2     # double-buffered bf16 weight
    avail = max(budget - w_block_bytes, 8 * per_row)
    tile_n = min(max_tile_n, max(8, (avail // per_row) // 8 * 8))
    tile_n = min(tile_n, _round_up(N, 8))
    # Keep >= 2 row steps when possible so both v7x TensorCores get work.
    while tile_n >= 16 and pl.cdiv(N, tile_n) < 2:
        tile_n = _round_up(tile_n // 2, 8)

    n_p = pl.cdiv(N, tile_n) * tile_n
    k_steps = in_dims_p // tile_k

    # ---- Pad inputs only when actually needed (no extra HBM pass on h). ----
    if n_p != N or in_dims_p != in_dims:
        h_in = jnp.pad(h, ((0, n_p - N), (0, in_dims_p - in_dims)))
    else:
        h_in = h
    w_bf = jnp.pad(w, ((0, in_dims_p - in_dims), (0, pad_c))).astype(jnp.bfloat16)
    # Padded bias columns get -1e30 so exp(logit - max) underflows to 0 and the
    # normalization over the real columns is untouched (W padding is zero).
    b_f32 = jnp.pad(b.astype(jnp.float32), ((0, 0), (0, pad_c)),
                    constant_values=_NEG_INF)

    grid = (n_p // tile_n, k_steps)
    cost = pl.CostEstimate(
        flops=2 * n_p * in_dims_p * out_p,
        transcendentals=n_p * out_p,
        bytes_accessed=(n_p * in_dims_p * h_bytes
                        + in_dims_p * out_p * 2
                        + out_p * 4
                        + n_p * out_p * out_bytes),
    )

    out = pl.pallas_call(
        cluster_kernel,
        out_shape=jax.ShapeDtypeStruct((n_p, out_p), out_dtype),
        grid_spec=pltpu.PrefetchScalarGridSpec(
            num_scalar_prefetch=0,
            grid=grid,
            in_specs=[
                # h row/k tile in native dtype; weight streamed per k block.
                pl.BlockSpec((tile_n, tile_k), lambda i, k: (i, k)),
                pl.BlockSpec((tile_k, out_p), lambda i, k: (k, 0)),
                pl.BlockSpec((1, out_p), lambda i, k: (0, 0)),
            ],
            out_specs=pl.BlockSpec((tile_n, out_p), lambda i, k: (i, 0)),
            scratch_shapes=[pltpu.VMEM((tile_n, out_p), jnp.float32)],
        ),
        compiler_params=pltpu.CompilerParams(
            dimension_semantics=("parallel", "arbitrary"),
            vmem_limit_bytes=vmem_limit,
        ),
        cost_estimate=cost,
    )(h_in, w_bf, b_f32)

    # Strip row / column padding only if any was added (skip the extra pass
    # over the result in the aligned case).
    if n_p == N and pad_c == 0:
        return out
    return out[:N, :out_dims]


if __name__ == "__main__":
    # Small, deterministic setup consistent with the module's forward.
    N, in_dims, out_dims = 16, 32, 32
    key = jax.random.PRNGKey(0)
    k_h, k_w, k_b = jax.random.split(key, 3)

    h = jax.random.normal(k_h, (N, in_dims), dtype=jnp.float32)

    # Deterministic "Linear" params (PyTorch-style uniform(-1/sqrt(in), 1/sqrt(in))).
    bound = 1.0 / (in_dims ** 0.5)
    # PyTorch weight is (out_dims, in_dims); we keep it pre-transposed.
    w = jax.random.uniform(k_w, (in_dims, out_dims), dtype=jnp.float32,
                           minval=-bound, maxval=bound)
    b = jax.random.uniform(k_b, (1, out_dims), dtype=jnp.float32,
                           minval=-bound, maxval=bound)

    out = cluster_layer(h, w, b)
    jax.block_until_ready(out)

    # Reference check (plain f32 JAX). Tolerance accounts for bf16 matmul
    # operands and the approximate reciprocal in the softmax denominator.
    ref = jax.nn.softmax(h @ w + b, axis=-1)
    assert out.shape == ref.shape
    assert out.dtype == h.dtype
    assert jnp.allclose(out, ref, atol=2e-2, rtol=0)
    assert jnp.allclose(jnp.sum(out, axis=-1), 1.0, atol=5e-3)

    print("KERNEL_OK")
</pallas_src>

<mosaic_0001>
module attributes {stable_mosaic.version = 11 : i64} {
  func.func @cluster_kernel(%arg0: i32, %arg1: i32, %arg2: memref<8x32xf32, #tpu.memory_space<vmem>>, %arg3: memref<32x128xbf16, #tpu.memory_space<vmem>>, %arg4: memref<1x128xf32, #tpu.memory_space<vmem>>, %arg5: memref<8x128xf32, #tpu.memory_space<vmem>>, %arg6: memref<8x128xf32, #tpu.memory_space<vmem>>) attributes {dimension_semantics = [#tpu.dimension_semantics<parallel>, #tpu.dimension_semantics<arbitrary>], iteration_bounds = array<i64: 2, 1>, scalar_prefetch = 0 : i64, scratch_operands = 1 : i64, tpu.core_type = #tpu.core_type<tc>, window_params = [{transform_indices = @transform_0, window_bounds = array<i64: 8, 32>}, {transform_indices = @transform_1, window_bounds = array<i64: 32, 128>}, {pipeline_mode = #tpu.pipeline_mode<synchronous>, transform_indices = @transform_2, window_bounds = array<i64: 1, 128>}, {transform_indices = @transform_3, window_bounds = array<i64: 8, 128>}]} {
    %c0 = arith.constant 0 : index
    %c0_0 = arith.constant 0 : index
    %0 = vector.load %arg2[%c0, %c0_0] : memref<8x32xf32, #tpu.memory_space<vmem>>, vector<8x32xf32>
    %1 = arith.truncf %0 : vector<8x32xf32> to vector<8x32xbf16>
    %c0_1 = arith.constant 0 : index
    %c0_2 = arith.constant 0 : index
    %2 = vector.load %arg3[%c0_1, %c0_2] : memref<32x128xbf16, #tpu.memory_space<vmem>>, vector<32x128xbf16>
    %cst = arith.constant dense<0.000000e+00> : vector<8x128xf32>
    %3 = tpu.matmul %1, %2, %cst {dimension_numbers = #tpu.dot_dimension_numbers<[1], [0], [0], [1], [0, 0, 1, 1], [], []>} : vector<8x32xbf16>, vector<32x128xbf16>, vector<8x128xf32> -> vector<8x128xf32>
    %c0_i32 = arith.constant 0 : i32
    %4 = arith.cmpi eq, %arg1, %c0_i32 : i32
    %5 = arith.extui %4 : i1 to i32
    %c0_i32_3 = arith.constant 0 : i32
    %6 = arith.cmpi ne, %5, %c0_i32_3 : i32
    scf.if %6 {
      %c0_8 = arith.constant 0 : index
      %c0_9 = arith.constant 0 : index
      %13 = vector.load %arg6[%c0_8, %c0_9] : memref<8x128xf32, #tpu.memory_space<vmem>>, vector<8x128xf32>
      tpu.vector_store %arg6[%c0_8, %c0_9], %3 {strides = array<i32>} : memref<8x128xf32, #tpu.memory_space<vmem>>, vector<8x128xf32>,
    } else {
    }
    %c0_i32_4 = arith.constant 0 : i32
    %7 = arith.cmpi sgt, %arg1, %c0_i32_4 : i32
    %8 = arith.extui %7 : i1 to i32
    %c0_i32_5 = arith.constant 0 : i32
    %9 = arith.cmpi ne, %8, %c0_i32_5 : i32
    scf.if %9 {
      %c0_8 = arith.constant 0 : index
      %c0_9 = arith.constant 0 : index
      %13 = vector.load %arg6[%c0_8, %c0_9] : memref<8x128xf32, #tpu.memory_space<vmem>>, vector<8x128xf32>
      %14 = arith.addf %13, %3 : vector<8x128xf32>
      %c0_10 = arith.constant 0 : index
      %c0_11 = arith.constant 0 : index
      %15 = vector.load %arg6[%c0_10, %c0_11] : memref<8x128xf32, #tpu.memory_space<vmem>>, vector<8x128xf32>
      tpu.vector_store %arg6[%c0_10, %c0_11], %14 {strides = array<i32>} : memref<8x128xf32, #tpu.memory_space<vmem>>, vector<8x128xf32>,
    } else {
    }
    %c0_i32_6 = arith.constant 0 : i32
    %10 = arith.cmpi eq, %arg1, %c0_i32_6 : i32
    %11 = arith.extui %10 : i1 to i32
    %c0_i32_7 = arith.constant 0 : i32
    %12 = arith.cmpi ne, %11, %c0_i32_7 : i32
    scf.if %12 {
      %c0_8 = arith.constant 0 : index
      %c0_9 = arith.constant 0 : index
      %13 = vector.load %arg6[%c0_8, %c0_9] : memref<8x128xf32, #tpu.memory_space<vmem>>, vector<8x128xf32>
      %c0_10 = arith.constant 0 : index
      %c0_11 = arith.constant 0 : index
      %14 = vector.load %arg4[%c0_10, %c0_11] : memref<1x128xf32, #tpu.memory_space<vmem>>, vector<1x128xf32>
      %15 = vector.broadcast %14 : vector<1x128xf32> to vector<8x128xf32>
      %16 = arith.addf %13, %15 : vector<8x128xf32>
      %cst_12 = arith.constant dense<0xFF800000> : vector<8xf32>
      %17 = vector.multi_reduction <maximumf>, %16, %cst_12 [1] : vector<8x128xf32> to vector<8xf32>
      %18 = vector.shape_cast %17 : vector<8xf32> to vector<8x1xf32>
      %19 = vector.broadcast %18 : vector<8x1xf32> to vector<8x128xf32>
      %20 = arith.subf %16, %19 : vector<8x128xf32>
      %21 = math.exp %20 : vector<8x128xf32>
      %cst_13 = arith.constant dense<0.000000e+00> : vector<8xf32>
      %22 = vector.multi_reduction <add>, %21, %cst_13 [1] : vector<8x128xf32> to vector<8xf32>
      %23 = vector.shape_cast %22 : vector<8xf32> to vector<8x1xf32>
      %24 = tpu.reciprocal %23 {approx = true} : vector<8x1xf32> -> vector<8x1xf32>
      %25 = vector.broadcast %24 : vector<8x1xf32> to vector<8x128xf32>
      %26 = arith.mulf %21, %25 : vector<8x128xf32>
      %c0_14 = arith.constant 0 : index
      %c0_15 = arith.constant 0 : index
      %27 = vector.load %arg5[%c0_14, %c0_15] : memref<8x128xf32, #tpu.memory_space<vmem>>, vector<8x128xf32>
      tpu.vector_store %arg5[%c0_14, %c0_15], %26 {strides = array<i32>} : memref<8x128xf32, #tpu.memory_space<vmem>>, vector<8x128xf32>,
    } else {
    }
    return
  }
  func.func @transform_0(%arg0: i32, %arg1: i32) -> (i32, i32) {
    %c0_i32 = arith.constant 0 : i32
    return %arg0, %arg1 : i32, i32
  }
  func.func @transform_1(%arg0: i32, %arg1: i32) -> (i32, i32) {
    %c0_i32 = arith.constant 0 : i32
    %c0_i32_0 = arith.constant 0 : i32
    return %arg1, %c0_i32 : i32, i32
  }
  func.func @transform_2(%arg0: i32, %arg1: i32) -> (i32, i32) {
    %c0_i32 = arith.constant 0 : i32
    %c0_i32_0 = arith.constant 0 : i32
    %c0_i32_1 = arith.constant 0 : i32
    return %c0_i32, %c0_i32_0 : i32, i32
  }
  func.func @transform_3(%arg0: i32, %arg1: i32) -> (i32, i32) {
    %c0_i32 = arith.constant 0 : i32
    %c0_i32_0 = arith.constant 0 : i32
    return %arg0, %c0_i32 : i32, i32
  }
}

</mosaic_0001>

<llo_original>
// kernel: tpu_custom_call.1
$region0: #{tpu_custom_call.1}
  #allocation0 [shape = 'u32[]', space=smem, size = 0x4, offset = 0x4, fixed_abs, tag = 'smem constant byte address 0x4 - core index']
  #allocation1 [shape = 'u32[72,128]{1,0:T(1,128)}', space=vmem, size = 0x9000, scoped, tag = 'internal scratch']
  #allocation2 [shape = 'f32[8,128]{1,0:T(8,128)}', space=vmem, size = 0x1000, scoped, tag = 'scratch operand']
  %s0 = inlined_call_operand.hbm [shape: f32[16,32], index: 0, kind: input, shape index: {}]
  %s1 = inlined_call_operand.hbm [shape: bf16[32,128], index: 1, kind: input, shape index: {}]
  %s2 = inlined_call_operand.vmem [shape: f32[1,128], index: 2, kind: input, shape index: {}]
  %s3 = inlined_call_operand.hbm [shape: f32[16,128], index: 3, kind: output, shape index: {}]
  %s4 = sld [smem:[#allocation0]]
  $region65: #{tpu_custom_call.1} parent=0
    _
  %s6 = ssub.s32 1, %s4
  %s7 = scalar_select 0, %s6, %s4
  $region1: #{tpu_custom_call.1} parent=0
    #allocation3 [shape = 'u8[8192]{0}', space=vmem, size = 0x2000, scoped, tag = 'input window, operand 0']
    #allocation4 [shape = 's32[2]{0}', space=sflag, size = 0x8, scoped, tag = 'scoped memory for tpu_custom_call.1']
    #allocation5 [shape = 's32[2]{0}', space=sflag, size = 0x8, scoped, tag = 'scoped memory for tpu_custom_call.1']
    #allocation6 [shape = 'u8[8192]{0}', space=vmem, size = 0x2000, scoped, tag = 'input window, operand 1, single buffered']
    #allocation7 [shape = 's32[1]{0}', space=sflag, size = 0x4, scoped, tag = 'scoped memory for tpu_custom_call.1']
    #allocation8 [shape = 'u8[8192]{0}', space=vmem, size = 0x2000, scoped, tag = 'output window, operand 0']
    %8 = vsyncpa [#allocation4], 0
    %s9 = scalar_lea.sflag [#allocation4], 1
    %10 = vsyncpa %s9, 0
    %11 = vsyncpa [#allocation7], 0
    %12 = vsyncpa [#allocation5], 0
    %s13 = scalar_lea.sflag [#allocation5], 1
    %14 = vsyncpa %s13, 0
    loop: start=0, step=1, limit=4
    $region2: #{tpu_custom_call.1} parent=1 // loop_pre_header
      _
    $region3: #{tpu_custom_call.1} parent=1 // loop_header
      %s16 = sphi 0, %s20
      %p17 = scmp.ge.s32.totalorder %s16, 4
      %s23 = sphi 0, %s35
      %s24 = sphi 0, %s31
      %s25 = sphi 0, %s23
      %s26 = sphi 0, %s24
      %s27 = sphi 0, %s25
      %s28 = sphi 0, %s26
      %s40 = sphi 0, %s42
      %s43 = sphi 0, %s40
      %s44 = sphi 0, %s43
      %s60 = sphi 0, %s44
      %s66 = sphi 0, %s68
      %s69 = sphi 0, %s66
      %s70 = sphi 0, %s69
      %s86 = sphi 0, %s70
      %s90 = sphi 0, %s90
      %s92 = sphi 0, %s90
      %s93 = sphi 0, %s92
      %s107 = sphi 0, %s93
      %s113 = sphi 0, %s115
      %s116 = sphi 0, %s113
      %s117 = sphi 0, %s116
      %s133 = sphi 0, %s117
    $region4: #{tpu_custom_call.1} parent=1 // loop_header_branch
      %19 = sbr.rel (%p17) target = $region8
    $region5: #{tpu_custom_call.1} parent=1 // loop_body
      %s21 = ssub.s32 %s16, 1
      %s22 = ssub.s32 %s16, 2
      %s29 = sadd.s32 1, %s24
      %p30 = scmp.ge.s32.totalorder %s29, 1
      %s31 = scalar_select %p30, 0, %s29
      %s32 = sadd.s32 1, %s23
      %s33 = scalar_select %p30, %s32, %s23
      %p34 = scmp.ge.s32.totalorder %s33, 2
      %s35 = scalar_select %p34, 0, %s33
      %s36 = ssub.s32 %s23, %s35
      %s37 = ssub.s32 %s24, %s31
      %s38 = sor.u32 %s36, %s37
      %p39 = scmp.eq.s32.totalorder %s38, 0
      %s41 = sadd.s32 %s40, 1
      %s42 = scalar_select %p39, %s40, %s41
      %p45 = pneg %p39
      %p46 = scmp.eq.s32.totalorder %s16, 1
      %p47 = por %p45, %p46
      %p48 = scmp.ne.s32.totalorder %s40, %s43
      %p49 = scmp.eq.s32.totalorder %s16, 0
      %p50 = por %p48, %p49
      %p51 = scmp.ne.s32.totalorder %s40, %s43
      %p52 = scmp.eq.s32.totalorder %s21, 1
      %p53 = por %p51, %p52
      %p54 = scmp.ne.s32.totalorder %s43, %s44
      %p55 = scmp.eq.s32.totalorder %s21, 0
      %p56 = por %p54, %p55
      %p57 = scmp.ne.s32.totalorder %s43, %s44
      %p58 = scmp.eq.s32.totalorder %s22, 1
      %p59 = por %p57, %p58
      %p61 = scmp.ne.s32.totalorder %s44, %s60
      %p62 = scmp.eq.s32.totalorder %s22, 0
      %p63 = por %p61, %p62
      %s64 = ssub.s32 %s24, %s31
      %p65 = scmp.eq.s32.totalorder %s64, 0
      %s67 = sadd.s32 %s66, 1
      %s68 = scalar_select %p65, %s66, %s67
      %p71 = pneg %p65
      %p72 = scmp.eq.s32.totalorder %s16, 1
      %p73 = por %p71, %p72
      %p74 = scmp.ne.s32.totalorder %s66, %s69
      %p75 = scmp.eq.s32.totalorder %s16, 0
      %p76 = por %p74, %p75
      %p77 = scmp.ne.s32.totalorder %s66, %s69
      %p78 = scmp.eq.s32.totalorder %s21, 1
      %p79 = por %p77, %p78
      %p80 = scmp.ne.s32.totalorder %s69, %s70
      %p81 = scmp.eq.s32.totalorder %s21, 0
      %p82 = por %p80, %p81
      %p83 = scmp.ne.s32.totalorder %s69, %s70
      %p84 = scmp.eq.s32.totalorder %s22, 1
      %p85 = por %p83, %p84
      %p87 = scmp.ne.s32.totalorder %s70, %s86
      %p88 = scmp.eq.s32.totalorder %s22, 0
      %p89 = por %p87, %p88
      %s91 = sadd.s32 %s90, 1
      %p94 = scmp.eq.s32.totalorder %s16, 1
      %p95 = scmp.ne.s32.totalorder %s90, %s92
      %p96 = scmp.eq.s32.totalorder %s16, 0
      %p97 = por %p95, %p96
      %p98 = scmp.ne.s32.totalorder %s90, %s92
      %p99 = scmp.eq.s32.totalorder %s21, 1
      %p100 = por %p98, %p99
      %p101 = scmp.ne.s32.totalorder %s92, %s93
      %p102 = scmp.eq.s32.totalorder %s21, 0
      %p103 = por %p101, %p102
      %p104 = scmp.ne.s32.totalorder %s92, %s93
      %p105 = scmp.eq.s32.totalorder %s22, 1
      %p106 = por %p104, %p105
      %p108 = scmp.ne.s32.totalorder %s93, %s107
      %p109 = scmp.eq.s32.totalorder %s22, 0
      %p110 = por %p108, %p109
      %s111 = ssub.s32 %s23, %s35
      %p112 = scmp.eq.s32.totalorder %s111, 0
      %s114 = sadd.s32 %s113, 1
      %s115 = scalar_select %p112, %s113, %s114
      %p118 = pneg %p112
      %p119 = scmp.eq.s32.totalorder %s16, 1
      %p120 = por %p118, %p119
      %p121 = scmp.ne.s32.totalorder %s113, %s116
      %p122 = scmp.eq.s32.totalorder %s16, 0
      %p123 = por %p121, %p122
      %p124 = scmp.ne.s32.totalorder %s113, %s116
      %p125 = scmp.eq.s32.totalorder %s21, 1
      %p126 = por %p124, %p125
      %p127 = scmp.ne.s32.totalorder %s116, %s117
      %p128 = scmp.eq.s32.totalorder %s21, 0
      %p129 = por %p127, %p128
      %p130 = scmp.ne.s32.totalorder %s116, %s117
      %p131 = scmp.eq.s32.totalorder %s22, 1
      %p132 = por %p130, %p131
      %p134 = scmp.ne.s32.totalorder %s117, %s133
      %p135 = scmp.eq.s32.totalorder %s22, 0
      %p136 = por %p134, %p135
      %p137 = scmp.le.s32.totalorder 1, %s16
      %p138 = scmp.lt.s32.totalorder %s16, 3
      %p139 = pnand %p137, %p138
      %p140 = pneg %p139
      // Predicated region
      $region9: #{tpu_custom_call.1} parent=5 // pred_check
        _
      $region10: #{tpu_custom_call.1} parent=5 // pred_check_branch
        %142 = sbr.rel (%p139) target = $region12
      $region11: #{tpu_custom_call.1} parent=5 // pred_region
        %s143 = ssub.s32 %s16, 1
        // Predicated region
        $region13: #{tpu_custom_call.1} parent=11 // pred_check
          %p144 = pneg %p82
        $region14: #{tpu_custom_call.1} parent=11 // pred_check_branch
          %146 = sbr.rel (%p144) target = $region16
        $region15: #{tpu_custom_call.1} parent=11 // pred_region
          %s147 = smul.u32 4, %s26
          %149 = vsyncadd [#allocation7], 0
          %s150 = smul.addr %s147, 4
          %s151 = scalar_lea.hbm %s1, %s150
          %s152 = sshll.u32 %s151, 4
          %s153 = int_to_ptr.hbm [resolvable:$true] %s152
          %s154 = sshll.u32 [#allocation6], 4
          %s155 = int_to_ptr.vmem [resolvable:$true] %s154
          %160 = dma.hbm_to_vmem [thread:$0]  %s153, 256, %s155, [#allocation7], 64, 64, 4
        $region16: #{tpu_custom_call.1} parent=11 // pred_fallthru
          _
        // Predicated region
        $region17: #{tpu_custom_call.1} parent=11 // pred_check
          %p161 = pneg %p103
        $region18: #{tpu_custom_call.1} parent=11 // pred_check_branch
          %163 = sbr.rel (%p161) target = $region20
        $region19: #{tpu_custom_call.1} parent=11 // pred_region
          _
        $region20: #{tpu_custom_call.1} parent=11 // pred_fallthru
          _
      $region12: #{tpu_custom_call.1} parent=5 // pred_fallthru
        _
      %p164 = scmp.lt.s32.totalorder %s16, 2
      // Predicated region
      $region21: #{tpu_custom_call.1} parent=5 // pred_check
        %p165 = pneg %p164
      $region22: #{tpu_custom_call.1} parent=5 // pred_check_branch
        %167 = sbr.rel (%p165) target = $region24
      $region23: #{tpu_custom_call.1} parent=5 // pred_region
        // Predicated region
        $region25: #{tpu_custom_call.1} parent=23 // pred_check
          %p168 = pneg %p50
        $region26: #{tpu_custom_call.1} parent=23 // pred_check_branch
          %170 = sbr.rel (%p168) target = $region28
        $region27: #{tpu_custom_call.1} parent=23 // pred_region
          %s171 = sand.u32 %s40, 1
          %s172 = scalar_lea.sflag [#allocation4], %s171
          %s173 = sand.u32 %s40, 1
          %s174 = smul.addr %s173, 8
          %s175 = scalar_lea.vmem [#allocation3], %s174
          %177 = vsyncadd %s172, 0
          %s178 = sadd.s32 %s24, %s23
          %s179 = smul.addr %s178, 8
          %s180 = scalar_lea.hbm %s0, %s179
          %s182 = sshll.u32 %s180, 4
          %s183 = int_to_ptr.hbm [resolvable:$true] %s182
          %s184 = sshll.u32 %s175, 4
          %s185 = int_to_ptr.vmem [resolvable:$true] %s184
          %187 = dma.hbm_to_vmem [thread:$0]  %s183, 128, %s185, %s172
        $region28: #{tpu_custom_call.1} parent=23 // pred_fallthru
          _
      $region24: #{tpu_custom_call.1} parent=5 // pred_fallthru
        _
      %p188 = scmp.le.s32.totalorder 1, %s16
      %p189 = scmp.lt.s32.totalorder %s16, 3
      %p190 = pnand %p188, %p189
      %p191 = pneg %p190
      // Predicated region
      $region29: #{tpu_custom_call.1} parent=5 // pred_check
        _
      $region30: #{tpu_custom_call.1} parent=5 // pred_check_branch
        %193 = sbr.rel (%p190) target = $region32
      $region31: #{tpu_custom_call.1} parent=5 // pred_region
        %s194 = ssub.s32 %s16, 1
        %s195 = sand.u32 %s43, 1
        %s196 = scalar_lea.sflag [#allocation4], %s195
        %s197 = sand.u32 %s43, 1
        %s198 = smul.addr %s197, 8
        %s199 = scalar_lea.vmem [#allocation3], %s198
        // Predicated region
        $region33: #{tpu_custom_call.1} parent=31 // pred_check
          %p200 = pneg %p56
        $region34: #{tpu_custom_call.1} parent=31 // pred_check_branch
          %202 = sbr.rel (%p200) target = $region36
        $region35: #{tpu_custom_call.1} parent=31 // pred_region
          %204 = dma.done %s196, 128
        $region36: #{tpu_custom_call.1} parent=31 // pred_fallthru
          _
        // Predicated region
        $region37: #{tpu_custom_call.1} parent=31 // pred_check
          %p205 = pneg %p82
        $region38: #{tpu_custom_call.1} parent=31 // pred_check_branch
          %207 = sbr.rel (%p205) target = $region40
        $region39: #{tpu_custom_call.1} parent=31 // pred_region
          %209 = dma.done [#allocation7], 256
        $region40: #{tpu_custom_call.1} parent=31 // pred_fallthru
          _
        %s210 = sand.u32 %s43, 1
        %s211 = scalar_lea.sflag [#allocation4], %s210
        %s212 = sand.u32 %s43, 1
        %s213 = smul.addr %s212, 8
        %s214 = scalar_lea.vmem [#allocation3], %s213
        %p215 = pneg %p56
        %p216 = pneg %p53
        %p217 = pneg %p82
        %p218 = pneg %p79
        %p219 = pneg %p103
        %p220 = pneg %p100
        %p221 = pneg %p129
        %p222 = pneg %p126
        %s223 = sand.u32 %s116, 1
        %s224 = scalar_lea.sflag [#allocation5], %s223
        %s225 = sand.u32 %s116, 1
        %s226 = smul.addr %s225, 8
        %s227 = scalar_lea.vmem [#allocation8], %s226
        %s228 = smul.u32 4, %s26
        %v230 = vld [vmem:[%s199] sm:$0xff]
        %v231 = vpack.c.bf16 %v230, %v230
        %v232 = vld [vmem:[#allocation6] sm:$0xf]
        %v233 = vld [vmem:[#allocation6 + $0x4] sm:$0xf]
        %v234 = vld [vmem:[#allocation6 + $0x8] sm:$0xf]
        %v235 = vld [vmem:[#allocation6 + $0xc] sm:$0xf]
        %v240 = vunpack.c.l.b16 %v232
        %v241 = vunpack.c.l.b16 %v233
        %v242 = vunpack.c.l.b16 %v234
        %v243 = vunpack.c.l.b16 %v235
        %v244 = vpack.c.b16 %v241, %v240
        %v245 = vpack.c.b16 %v243, %v242
        %vm248 = vcmask 261120
        %v250 = vsel %vm248, %v231, 0
        %252 = vmatpush.bf16.msra.mxu0 0
        %253 = vmatpush.bf16.msra.mxu0 0
        %254 = vmatpush.bf16.msra.mxu0 0
        %255 = vmatpush.bf16.msra.mxu0 0
        %256 = vmatpush.bf16.msra.mxu0 0
        %257 = vmatpush.bf16.msra.mxu0 0
        %258 = vmatpush.bf16.msra.mxu0 %v245
        %259 = vmatpush.bf16.msra.mxu0 %v244
        %260 = vmatmul.bf16.gmra.mxu0 %v250
        %v261 = vpop.f32.mrf.mxu0
        %v262 = vadd.f32 0.0, %v261
        %v263 = vpop.f32.mrf.mxu0
        %264 = vdwg.mxu0
        %p265 = scmp.eq.s32.totalorder %s26, 0
        // Predicated region
        $region41: #{tpu_custom_call.1} parent=31 // pred_check
          %p266 = pneg %p265
        $region42: #{tpu_custom_call.1} parent=31 // pred_check_branch
          %268 = sbr.rel (%p266) target = $region44
        $region43: #{tpu_custom_call.1} parent=31 // pred_region
          %269 = vst [vmem:[#allocation2] sm:$0xff] %v262
        $region44: #{tpu_custom_call.1} parent=31 // pred_fallthru
          _
        %p270 = scmp.gt.s32.totalorder %s26, 0
        // Predicated region
        $region45: #{tpu_custom_call.1} parent=31 // pred_check
          %p271 = pneg %p270
        $region46: #{tpu_custom_call.1} parent=31 // pred_check_branch
          %273 = sbr.rel (%p271) target = $region48
        $region47: #{tpu_custom_call.1} parent=31 // pred_region
          %v274 = vld [vmem:[#allocation2] sm:$0xff]
          %v275 = vadd.f32 %v274, %v262
          %276 = vst [vmem:[#allocation2] sm:$0xff] %v275
        $region48: #{tpu_custom_call.1} parent=31 // pred_fallthru
          _
        // Predicated region
        $region49: #{tpu_custom_call.1} parent=31 // pred_check
          %p277 = pneg %p265
        $region50: #{tpu_custom_call.1} parent=31 // pred_check_branch
          %279 = sbr.rel (%p277) target = $region52
        $region51: #{tpu_custom_call.1} parent=31 // pred_region
          %v280 = vld [vmem:[#allocation2] sm:$0xff]
          %v281 = vld [vmem:[%s2] sm:$0x1]
          %v283 = vperm.slane %v281, 0
          %v285 = vadd.f32 %v280, %v283
          %286 = vmax.xlane.f32.xlu0 %v285
          %v287 = vpop.xlane.xlu0 %286
          %v288 = vsub.f32 %v285, %v287
          %v289 = vmul.f32 %v288, 1.442695
          %v290 = vpow.pop %v289
          %291 = vadd.xlane.f32.xlu0 %v290
          %v292 = vpop.xlane.xlu0 %291
          %v293 = vrcp.pop %v292
          %v294 = vmul.f32 %v290, %v293
          %295 = vst [vmem:[%s227] sm:$0xff] %v294
        $region52: #{tpu_custom_call.1} parent=31 // pred_fallthru
          _
        %s296 = sand.u32 %s116, 1
        %s297 = scalar_lea.sflag [#allocation5], %s296
        %s298 = sand.u32 %s116, 1
        %s299 = smul.addr %s298, 8
        %s300 = scalar_lea.vmem [#allocation8], %s299
        // Predicated region
        $region53: #{tpu_custom_call.1} parent=31 // pred_check
          %p301 = pneg %p126
        $region54: #{tpu_custom_call.1} parent=31 // pred_check_branch
          %303 = sbr.rel (%p301) target = $region56
        $region55: #{tpu_custom_call.1} parent=31 // pred_region
          %305 = vsyncadd %s297, 0
          %s306 = smul.addr %s25, 8
          %s307 = scalar_lea.hbm %s3, %s306
          %s309 = sshll.u32 %s300, 4
          %s310 = int_to_ptr.vmem [resolvable:$true] %s309
          %s311 = sshll.u32 %s307, 4
          %s312 = int_to_ptr.hbm [resolvable:$true] %s311
          %314 = dma.vmem_to_hbm [thread:$0]  %s310, 128, %s312, %s297
        $region56: #{tpu_custom_call.1} parent=31 // pred_fallthru
          _
      $region32: #{tpu_custom_call.1} parent=5 // pred_fallthru
        _
      %p315 = scmp.le.s32.totalorder 2, %s16
      // Predicated region
      $region57: #{tpu_custom_call.1} parent=5 // pred_check
        %p316 = pneg %p315
      $region58: #{tpu_custom_call.1} parent=5 // pred_check_branch
        %318 = sbr.rel (%p316) target = $region60
      $region59: #{tpu_custom_call.1} parent=5 // pred_region
        %s319 = ssub.s32 %s16, 2
        // Predicated region
        $region61: #{tpu_custom_call.1} parent=59 // pred_check
          %p320 = pneg %p132
        $region62: #{tpu_custom_call.1} parent=59 // pred_check_branch
          %322 = sbr.rel (%p320) target = $region64
        $region63: #{tpu_custom_call.1} parent=59 // pred_region
          %s323 = sand.u32 %s117, 1
          %s324 = scalar_lea.sflag [#allocation5], %s323
          %s325 = sand.u32 %s117, 1
          %s326 = smul.addr %s325, 8
          %s327 = scalar_lea.vmem [#allocation8], %s326
          %329 = dma.done %s324, 128
        $region64: #{tpu_custom_call.1} parent=59 // pred_fallthru
          _
      $region60: #{tpu_custom_call.1} parent=5 // pred_fallthru
        _
    $region6: #{tpu_custom_call.1} parent=1 // loop_footer
      %s20 = sadd.s32 1, %s16
    $region7: #{tpu_custom_call.1} parent=1 // loop_footer_branch
      %15 = sbr.rel target = $region3
    $region8: #{tpu_custom_call.1} parent=1 // loop_exit
      _
    %330 = vsyncpa [#allocation4], 1
    %s331 = scalar_lea.sflag [#allocation4], 1
    %332 = vsyncpa %s331, 1
    %333 = vsyncpa [#allocation7], 1
    %334 = vsyncpa [#allocation5], 1
    %s335 = scalar_lea.sflag [#allocation5], 1
    %336 = vsyncpa %s335, 1

</llo_original>
